<compile_context>
chip_gen: v5e
topology: v5e:2x2
jax: 0.10.0
libtpu: 0.0.40
codegen_flags: <defaults>
</compile_context>

<pallas_src>
import jax
import jax.numpy as jnp
from jax.experimental import pallas as pl
from jax.experimental.pallas import tpu as pltpu


def _round_up(x, m):
    return (x + m - 1) // m * m


def _cdiv(a, b):
    return (a + b - 1) // b


# ----------------------------------------------------------------------------
# Kernel: the whole Linear -> LeakyReLU(0.2) stack fused in one pallas_call.
# Intermediate activations never leave vregs/VMEM.
# ----------------------------------------------------------------------------
def _fused_mlp_kernel(x_ref, *refs):
    """refs = (w0, b0, w1, b1, ..., o_ref). Layer loop is unrolled at trace time."""
    o_ref = refs[-1]
    wb = refs[:-1]
    n_layers = len(wb) // 2

    h = x_ref[...]  # f32 activations throughout (v5e VPU has no bf16 path)
    for i in range(n_layers):
        w = wb[2 * i][...]
        b = wb[2 * i + 1][...]  # (1, Dout) f32 -> broadcasts over batch rows
        lhs = h if h.dtype == w.dtype else h.astype(w.dtype)  # cast only at the MXU
        y = jnp.dot(lhs, w, preferred_element_type=jnp.float32) + b
        h = jnp.maximum(y, 0.2 * y)  # LeakyReLU(0.2): single VALU op
    o_ref[...] = h.astype(o_ref.dtype)


# ----------------------------------------------------------------------------
# Parameter construction / one-time padding (outside the per-call hot path).
# ----------------------------------------------------------------------------
def init_raw_net_params(key, n_input, hidden_layers):
    """nn.Linear-style init: U(-1/sqrt(fan_in), 1/sqrt(fan_in)) for W and b."""
    params = []
    prev = n_input
    for d in hidden_layers:
        key, kw, kb = jax.random.split(key, 3)
        bound = 1.0 / (prev ** 0.5)
        w = jax.random.uniform(kw, (prev, d), jnp.float32, -bound, bound)
        b = jax.random.uniform(kb, (1, d), jnp.float32, -bound, bound)
        params.append((w, b))
        prev = d
    return params


def pad_raw_net_params(params, compute_dtype=jnp.float32):
    """Zero-pad W/b feature dims to 128 multiples ONCE.

    Zero padding keeps the math exact: padded lanes stay 0 through LeakyReLU
    and contribute 0 downstream. Weights are stored in `compute_dtype`
    (bf16 recommended on v6e/v7x); biases stay f32 (added post-MXU in f32).
    Returns a flat list [w0p, b0p, w1p, b1p, ...].
    """
    padded = []
    for w, b in params:
        din, dout = w.shape
        din_p, dout_p = _round_up(din, 128), _round_up(dout, 128)
        wp = jnp.zeros((din_p, dout_p), compute_dtype).at[:din, :dout].set(
            w.astype(compute_dtype))
        bp = jnp.zeros((1, dout_p), jnp.float32).at[:, :dout].set(
            b.astype(jnp.float32))
        padded.extend([wp, bp])
    return padded


# ----------------------------------------------------------------------------
# Forward pass.
# ----------------------------------------------------------------------------
def raw_net_forward(x, padded_params, out_dim, *, batch_tile=1024):
    """Fused Linear->LeakyReLU(0.2)->Dropout(eval=identity) stack.

    x: (B, Din) f32.  padded_params: output of pad_raw_net_params.
    out_dim: true (unpadded) output feature dim (static under jit).
    """
    B, Din = x.shape
    n_layers = len(padded_params) // 2
    pdims = [padded_params[0].shape[0]] + [
        padded_params[2 * i].shape[1] for i in range(n_layers)
    ]
    x_itemsize = jnp.dtype(x.dtype).itemsize
    wb_bytes = sum(int(p.size) * jnp.dtype(p.dtype).itemsize for p in padded_params)

    # Single-buffer the (grid-invariant) weights only when they are big enough
    # for the extra buffer to matter on v7x's 64 MiB VMEM.
    single_buffer_weights = wb_bytes > (4 << 20)
    w_buf_factor = 1 if single_buffer_weights else 2

    # ---- batch tile selection -------------------------------------------
    Bs = _round_up(B, 8)  # sublane-aligned batch
    # >=2 grid steps when possible so both v7x TensorCores get work.
    TB = max(8, min(_round_up(batch_tile, 8), _round_up(max(_cdiv(Bs, 2), 8), 8)))

    def vmem_budget(tb):
        io = 2 * tb * (pdims[0] + pdims[-1]) * x_itemsize   # double-buffered x/out tiles
        wts = w_buf_factor * wb_bytes                       # resident weight/bias buffers
        live = tb * max(pdims) * 4                          # largest live f32 intermediate
        return io + wts + live

    VMEM_CAP = 48 * 1024 * 1024  # conservative for v7x (64 MiB physical)
    while vmem_budget(TB) > VMEM_CAP and TB > 8:
        TB = max(8, _round_up(TB // 2, 8))

    Bp = _round_up(Bs, TB)

    # ---- input padding (feature dim mandatory; batch pad only if needed) --
    if Din != pdims[0] or B != Bp:
        xp = jnp.zeros((Bp, pdims[0]), x.dtype).at[:B, :Din].set(x)
    else:
        xp = x

    grid = (Bp // TB,)

    # ---- specs -------------------------------------------------------------
    in_specs = [pl.BlockSpec((TB, pdims[0]), lambda i: (i, 0))]
    for p in padded_params:
        if single_buffer_weights:
            in_specs.append(
                pl.BlockSpec(p.shape, lambda i: (0, 0), pipeline_mode=pl.Buffered(1)))
        else:
            in_specs.append(pl.BlockSpec(p.shape, lambda i: (0, 0)))
    out_specs = pl.BlockSpec((TB, pdims[-1]), lambda i: (i, 0))

    flops = sum(2 * Bp * a * c for a, c in zip(pdims[:-1], pdims[1:]))
    bytes_accessed = (
        int(xp.size) * x_itemsize + wb_bytes + Bp * pdims[-1] * 4
    )
    cost = pl.CostEstimate(flops=flops, transcendentals=0,
                           bytes_accessed=bytes_accessed)

    vmem_limit = int(min(max(vmem_budget(TB) + (4 << 20), 32 << 20), 56 << 20))

    out = pl.pallas_call(
        _fused_mlp_kernel,
        out_shape=jax.ShapeDtypeStruct((Bp, pdims[-1]), jnp.float32),
        grid=grid,
        in_specs=in_specs,
        out_specs=out_specs,
        compiler_params=pltpu.CompilerParams(
            dimension_semantics=("parallel",),
            vmem_limit_bytes=vmem_limit,
        ),
        cost_estimate=cost,
    )(xp, *padded_params)

    if Bp != B or pdims[-1] != out_dim:
        out = out[:B, :out_dim]
    return out


if __name__ == "__main__":
    n_input = 32
    hidden_layers = [64, 32]
    batch = 8

    key = jax.random.PRNGKey(0)
    key, kx = jax.random.split(key)
    x = jax.random.normal(kx, (batch, n_input), jnp.float32)
    params = init_raw_net_params(key, n_input, hidden_layers)

    # Plain-JAX reference of the implied forward (eval mode: dropout = identity).
    ref = x
    for w, b in params:
        y = ref @ w + b
        ref = jnp.maximum(y, 0.2 * y)

    fwd = jax.jit(raw_net_forward, static_argnames=("out_dim", "batch_tile"))

    # f32 path (exact vs reference).
    padded_f32 = pad_raw_net_params(params)
    out = fwd(x, padded_f32, out_dim=hidden_layers[-1])
    jax.block_until_ready(out)
    assert out.shape == (batch, hidden_layers[-1])
    assert jnp.allclose(out, ref, atol=1e-5, rtol=1e-5)

    # bf16 MXU-operand path (v6e/v7x-friendly: halves weight DMA, f32 accumulate).
    padded_bf16 = pad_raw_net_params(params, compute_dtype=jnp.bfloat16)
    out_bf16 = fwd(x, padded_bf16, out_dim=hidden_layers[-1])
    jax.block_until_ready(out_bf16)
    assert jnp.allclose(out_bf16, ref, atol=5e-2, rtol=5e-2)

    print("KERNEL_OK")
</pallas_src>

<mosaic_0001>
module attributes {stable_mosaic.version = 11 : i64} {
  func.func @_fused_mlp_kernel(%arg0: i32, %arg1: memref<8x128xf32, #tpu.memory_space<vmem>>, %arg2: memref<128x128xf32, #tpu.memory_space<vmem>>, %arg3: memref<1x128xf32, #tpu.memory_space<vmem>>, %arg4: memref<128x128xf32, #tpu.memory_space<vmem>>, %arg5: memref<1x128xf32, #tpu.memory_space<vmem>>, %arg6: memref<8x128xf32, #tpu.memory_space<vmem>>) attributes {dimension_semantics = [#tpu.dimension_semantics<parallel>], iteration_bounds = array<i64: 1>, scalar_prefetch = 0 : i64, scratch_operands = 0 : i64, tpu.core_type = #tpu.core_type<tc>, window_params = [{transform_indices = @transform_0, window_bounds = array<i64: 8, 128>}, {pipeline_mode = #tpu.pipeline_mode<synchronous>, transform_indices = @transform_1, window_bounds = array<i64: 128, 128>}, {pipeline_mode = #tpu.pipeline_mode<synchronous>, transform_indices = @transform_2, window_bounds = array<i64: 1, 128>}, {pipeline_mode = #tpu.pipeline_mode<synchronous>, transform_indices = @transform_3, window_bounds = array<i64: 128, 128>}, {pipeline_mode = #tpu.pipeline_mode<synchronous>, transform_indices = @transform_4, window_bounds = array<i64: 1, 128>}, {transform_indices = @transform_5, window_bounds = array<i64: 8, 128>}]} {
    %c0 = arith.constant 0 : index
    %c0_0 = arith.constant 0 : index
    %0 = vector.load %arg1[%c0, %c0_0] : memref<8x128xf32, #tpu.memory_space<vmem>>, vector<8x128xf32>
    %c0_1 = arith.constant 0 : index
    %c0_2 = arith.constant 0 : index
    %1 = vector.load %arg2[%c0_1, %c0_2] : memref<128x128xf32, #tpu.memory_space<vmem>>, vector<128x128xf32>
    %c0_3 = arith.constant 0 : index
    %c0_4 = arith.constant 0 : index
    %2 = vector.load %arg3[%c0_3, %c0_4] : memref<1x128xf32, #tpu.memory_space<vmem>>, vector<1x128xf32>
    %cst = arith.constant dense<0.000000e+00> : vector<8x128xf32>
    %3 = tpu.matmul %0, %1, %cst {dimension_numbers = #tpu.dot_dimension_numbers<[1], [0], [0], [1], [0, 0, 1, 1], [], []>} : vector<8x128xf32>, vector<128x128xf32>, vector<8x128xf32> -> vector<8x128xf32>
    %4 = vector.broadcast %2 : vector<1x128xf32> to vector<8x128xf32>
    %5 = arith.addf %3, %4 : vector<8x128xf32>
    %cst_5 = arith.constant 2.000000e-01 : f32
    %6 = vector.broadcast %cst_5 : f32 to vector<8x128xf32>
    %7 = arith.mulf %6, %5 : vector<8x128xf32>
    %8 = arith.maximumf %5, %7 : vector<8x128xf32>
    %c0_6 = arith.constant 0 : index
    %c0_7 = arith.constant 0 : index
    %9 = vector.load %arg4[%c0_6, %c0_7] : memref<128x128xf32, #tpu.memory_space<vmem>>, vector<128x128xf32>
    %c0_8 = arith.constant 0 : index
    %c0_9 = arith.constant 0 : index
    %10 = vector.load %arg5[%c0_8, %c0_9] : memref<1x128xf32, #tpu.memory_space<vmem>>, vector<1x128xf32>
    %cst_10 = arith.constant dense<0.000000e+00> : vector<8x128xf32>
    %11 = tpu.matmul %8, %9, %cst_10 {dimension_numbers = #tpu.dot_dimension_numbers<[1], [0], [0], [1], [0, 0, 1, 1], [], []>} : vector<8x128xf32>, vector<128x128xf32>, vector<8x128xf32> -> vector<8x128xf32>
    %12 = vector.broadcast %10 : vector<1x128xf32> to vector<8x128xf32>
    %13 = arith.addf %11, %12 : vector<8x128xf32>
    %cst_11 = arith.constant 2.000000e-01 : f32
    %14 = vector.broadcast %cst_11 : f32 to vector<8x128xf32>
    %15 = arith.mulf %14, %13 : vector<8x128xf32>
    %16 = arith.maximumf %13, %15 : vector<8x128xf32>
    %c0_12 = arith.constant 0 : index
    %c0_13 = arith.constant 0 : index
    %17 = vector.load %arg6[%c0_12, %c0_13] : memref<8x128xf32, #tpu.memory_space<vmem>>, vector<8x128xf32>
    tpu.vector_store %arg6[%c0_12, %c0_13], %16 {strides = array<i32>} : memref<8x128xf32, #tpu.memory_space<vmem>>, vector<8x128xf32>,
    return
  }
  func.func @transform_0(%arg0: i32) -> (i32, i32) {
    %c0_i32 = arith.constant 0 : i32
    %c0_i32_0 = arith.constant 0 : i32
    return %arg0, %c0_i32 : i32, i32
  }
  func.func @transform_1(%arg0: i32) -> (i32, i32) {
    %c0_i32 = arith.constant 0 : i32
    %c0_i32_0 = arith.constant 0 : i32
    %c0_i32_1 = arith.constant 0 : i32
    return %c0_i32, %c0_i32_0 : i32, i32
  }
  func.func @transform_2(%arg0: i32) -> (i32, i32) {
    %c0_i32 = arith.constant 0 : i32
    %c0_i32_0 = arith.constant 0 : i32
    %c0_i32_1 = arith.constant 0 : i32
    return %c0_i32, %c0_i32_0 : i32, i32
  }
  func.func @transform_3(%arg0: i32) -> (i32, i32) {
    %c0_i32 = arith.constant 0 : i32
    %c0_i32_0 = arith.constant 0 : i32
    %c0_i32_1 = arith.constant 0 : i32
    return %c0_i32, %c0_i32_0 : i32, i32
  }
  func.func @transform_4(%arg0: i32) -> (i32, i32) {
    %c0_i32 = arith.constant 0 : i32
    %c0_i32_0 = arith.constant 0 : i32
    %c0_i32_1 = arith.constant 0 : i32
    return %c0_i32, %c0_i32_0 : i32, i32
  }
  func.func @transform_5(%arg0: i32) -> (i32, i32) {
    %c0_i32 = arith.constant 0 : i32
    %c0_i32_0 = arith.constant 0 : i32
    return %arg0, %c0_i32 : i32, i32
  }
}

</mosaic_0001>

<llo_original>
// kernel: raw_net_forward.1
$region0: #{raw_net_forward.1}
  #allocation0 [shape = 'u32[]', space=smem, size = 0x4, offset = 0x4, fixed_abs, tag = 'smem constant byte address 0x4 - core index']
  #allocation1 [shape = 'u32[72,128]{1,0:T(1,128)}', space=vmem, size = 0x9000, scoped, tag = 'internal scratch']
  %s0 = inlined_call_operand.vmem [shape: f32[8,128], index: 0, kind: input, shape index: {}]
  %s1 = inlined_call_operand.hbm [shape: f32[128,128], index: 1, kind: input, shape index: {}]
  %s2 = inlined_call_operand.vmem [shape: f32[1,128], index: 2, kind: input, shape index: {}]
  %s3 = inlined_call_operand.hbm [shape: f32[128,128], index: 3, kind: input, shape index: {}]
  %s4 = inlined_call_operand.vmem [shape: f32[1,128], index: 4, kind: input, shape index: {}]
  %s5 = inlined_call_operand.hbm [shape: f32[8,128], index: 5, kind: output, shape index: {}]
  %s6 = sld [smem:[#allocation0]]
  $region38: #{raw_net_forward.1} parent=0
    _
  %s8 = ssub.s32 1, %s6
  %s9 = scalar_select 0, %s8, %s6
  $region1: #{raw_net_forward.1} parent=0
    #allocation2 [shape = 'u8[65536]{0}', space=vmem, size = 0x10000, scoped, tag = 'input window, operand 1, single buffered']
    #allocation3 [shape = 's32[1]{0}', space=sflag, size = 0x4, scoped, tag = 'scoped memory for raw_net_forward.1']
    #allocation4 [shape = 's32[1]{0}', space=sflag, size = 0x4, scoped, tag = 'scoped memory for raw_net_forward.1']
    #allocation5 [shape = 'u8[65536]{0}', space=vmem, size = 0x10000, scoped, tag = 'input window, operand 3, single buffered']
    #allocation6 [shape = 's32[1]{0}', space=sflag, size = 0x4, scoped, tag = 'scoped memory for raw_net_forward.1']
    #allocation7 [shape = 'u8[4096]{0}', space=vmem, size = 0x1000, scoped, tag = 'output window, operand 0, single buffered']
    %10 = vsyncpa [#allocation3], 0
    %11 = vsyncpa [#allocation6], 0
    %12 = vsyncpa [#allocation4], 0
    // Predicated region
    $region2: #{raw_net_forward.1} parent=1 // pred_check
      _
    $region3: #{raw_net_forward.1} parent=1 // pred_check_branch
      %14 = sbr.rel (0) target = $region5
    $region4: #{raw_net_forward.1} parent=1 // pred_region
      _
    $region5: #{raw_net_forward.1} parent=1 // pred_fallthru
      _
    // Predicated region
    $region6: #{raw_net_forward.1} parent=1 // pred_check
      _
    $region7: #{raw_net_forward.1} parent=1 // pred_check_branch
      %16 = sbr.rel (0) target = $region9
    $region8: #{raw_net_forward.1} parent=1 // pred_region
      %18 = vsyncadd [#allocation3], 0
      %s19 = sshll.u32 %s1, 4
      %s20 = int_to_ptr.hbm [resolvable:$true] %s19
      %s21 = sshll.u32 [#allocation2], 4
      %s22 = int_to_ptr.vmem [resolvable:$true] %s21
      %27 = dma.hbm_to_vmem [thread:$0]  %s20, 2048, %s22, [#allocation3], 128, 128, 8
    $region9: #{raw_net_forward.1} parent=1 // pred_fallthru
      _
    // Predicated region
    $region10: #{raw_net_forward.1} parent=1 // pred_check
      _
    $region11: #{raw_net_forward.1} parent=1 // pred_check_branch
      %29 = sbr.rel (0) target = $region13
    $region12: #{raw_net_forward.1} parent=1 // pred_region
      _
    $region13: #{raw_net_forward.1} parent=1 // pred_fallthru
      _
    // Predicated region
    $region14: #{raw_net_forward.1} parent=1 // pred_check
      _
    $region15: #{raw_net_forward.1} parent=1 // pred_check_branch
      %31 = sbr.rel (0) target = $region17
    $region16: #{raw_net_forward.1} parent=1 // pred_region
      %33 = vsyncadd [#allocation6], 0
      %s34 = sshll.u32 %s3, 4
      %s35 = int_to_ptr.hbm [resolvable:$true] %s34
      %s36 = sshll.u32 [#allocation5], 4
      %s37 = int_to_ptr.vmem [resolvable:$true] %s36
      %42 = dma.hbm_to_vmem [thread:$0]  %s35, 2048, %s37, [#allocation6], 128, 128, 8
    $region17: #{raw_net_forward.1} parent=1 // pred_fallthru
      _
    // Predicated region
    $region18: #{raw_net_forward.1} parent=1 // pred_check
      _
    $region19: #{raw_net_forward.1} parent=1 // pred_check_branch
      %44 = sbr.rel (0) target = $region21
    $region20: #{raw_net_forward.1} parent=1 // pred_region
      _
    $region21: #{raw_net_forward.1} parent=1 // pred_fallthru
      _
    // Predicated region
    $region22: #{raw_net_forward.1} parent=1 // pred_check
      _
    $region23: #{raw_net_forward.1} parent=1 // pred_check_branch
      %46 = sbr.rel (0) target = $region25
    $region24: #{raw_net_forward.1} parent=1 // pred_region
      %48 = dma.done [#allocation3], 2048
    $region25: #{raw_net_forward.1} parent=1 // pred_fallthru
      _
    // Predicated region
    $region26: #{raw_net_forward.1} parent=1 // pred_check
      _
    $region27: #{raw_net_forward.1} parent=1 // pred_check_branch
      %50 = sbr.rel (0) target = $region29
    $region28: #{raw_net_forward.1} parent=1 // pred_region
      %52 = dma.done [#allocation6], 2048
    $region29: #{raw_net_forward.1} parent=1 // pred_fallthru
      _
    %v53 = vld [vmem:[%s0] sm:$0xff]
    %v54 = vld [vmem:[#allocation2] sm:$0xff]
    %v55 = vld [vmem:[#allocation2 + $0x8] sm:$0xff]
    %v56 = vld [vmem:[#allocation2 + $0x10] sm:$0xff]
    %v57 = vld [vmem:[#allocation2 + $0x18] sm:$0xff]
    %v58 = vld [vmem:[#allocation2 + $0x20] sm:$0xff]
    %v59 = vld [vmem:[#allocation2 + $0x28] sm:$0xff]
    %v60 = vld [vmem:[#allocation2 + $0x30] sm:$0xff]
    %v61 = vld [vmem:[#allocation2 + $0x38] sm:$0xff]
    %v62 = vld [vmem:[#allocation2 + $0x40] sm:$0xff]
    %v63 = vld [vmem:[#allocation2 + $0x48] sm:$0xff]
    %v64 = vld [vmem:[#allocation2 + $0x50] sm:$0xff]
    %v65 = vld [vmem:[#allocation2 + $0x58] sm:$0xff]
    %v66 = vld [vmem:[#allocation2 + $0x60] sm:$0xff]
    %v67 = vld [vmem:[#allocation2 + $0x68] sm:$0xff]
    %v68 = vld [vmem:[#allocation2 + $0x70] sm:$0xff]
    %v69 = vld [vmem:[#allocation2 + $0x78] sm:$0xff]
    %v70 = vld [vmem:[%s2] sm:$0x1]
    %v72 = vperm.slane %v70, 0
    %74 = vmatpush.msra.mxu0 %v69
    %75 = vmatpush.msra.mxu0 %v68
    %76 = vmatpush.msra.mxu0 %v67
    %77 = vmatpush.msra.mxu0 %v66
    %78 = vmatpush.msra.mxu0 %v65
    %79 = vmatpush.msra.mxu0 %v64
    %80 = vmatpush.msra.mxu0 %v63
    %81 = vmatpush.msra.mxu0 %v62
    %82 = vmatpush.msra.mxu0 %v61
    %83 = vmatpush.msra.mxu0 %v60
    %84 = vmatpush.msra.mxu0 %v59
    %85 = vmatpush.msra.mxu0 %v58
    %86 = vmatpush.msra.mxu0 %v57
    %87 = vmatpush.msra.mxu0 %v56
    %88 = vmatpush.msra.mxu0 %v55
    %89 = vmatpush.msra.mxu0 %v54
    %90 = vmatmul.f32.gmra.mxu0 %v53
    %v91 = vpop.f32.mrf.mxu0
    %v92 = vadd.f32 %v72, %v91
    %93 = vdwg.mxu0
    %v94 = vmul.f32 %v92, 0.2
    %v95 = vmax.f32 %v92, %v94
    %v96 = vld [vmem:[#allocation5] sm:$0xff]
    %v97 = vld [vmem:[#allocation5 + $0x8] sm:$0xff]
    %v98 = vld [vmem:[#allocation5 + $0x10] sm:$0xff]
    %v99 = vld [vmem:[#allocation5 + $0x18] sm:$0xff]
    %v100 = vld [vmem:[#allocation5 + $0x20] sm:$0xff]
    %v101 = vld [vmem:[#allocation5 + $0x28] sm:$0xff]
    %v102 = vld [vmem:[#allocation5 + $0x30] sm:$0xff]
    %v103 = vld [vmem:[#allocation5 + $0x38] sm:$0xff]
    %v104 = vld [vmem:[#allocation5 + $0x40] sm:$0xff]
    %v105 = vld [vmem:[#allocation5 + $0x48] sm:$0xff]
    %v106 = vld [vmem:[#allocation5 + $0x50] sm:$0xff]
    %v107 = vld [vmem:[#allocation5 + $0x58] sm:$0xff]
    %v108 = vld [vmem:[#allocation5 + $0x60] sm:$0xff]
    %v109 = vld [vmem:[#allocation5 + $0x68] sm:$0xff]
    %v110 = vld [vmem:[#allocation5 + $0x70] sm:$0xff]
    %v111 = vld [vmem:[#allocation5 + $0x78] sm:$0xff]
    %v112 = vld [vmem:[%s4] sm:$0x1]
    %v114 = vperm.slane %v112, 0
    %116 = vmatpush.msra.mxu0 %v111
    %117 = vmatpush.msra.mxu0 %v110
    %118 = vmatpush.msra.mxu0 %v109
    %119 = vmatpush.msra.mxu0 %v108
    %120 = vmatpush.msra.mxu0 %v107
    %121 = vmatpush.msra.mxu0 %v106
    %122 = vmatpush.msra.mxu0 %v105
    %123 = vmatpush.msra.mxu0 %v104
    %124 = vmatpush.msra.mxu0 %v103
    %125 = vmatpush.msra.mxu0 %v102
    %126 = vmatpush.msra.mxu0 %v101
    %127 = vmatpush.msra.mxu0 %v100
    %128 = vmatpush.msra.mxu0 %v99
    %129 = vmatpush.msra.mxu0 %v98
    %130 = vmatpush.msra.mxu0 %v97
    %131 = vmatpush.msra.mxu0 %v96
    %132 = vmatmul.f32.gmra.mxu0 %v95
    %v133 = vpop.f32.mrf.mxu0
    %v134 = vadd.f32 %v114, %v133
    %135 = vdwg.mxu0
    %v136 = vmul.f32 %v134, 0.2
    %v137 = vmax.f32 %v134, %v136
    %138 = vst [vmem:[#allocation7] sm:$0xff] %v137
    // Predicated region
    $region30: #{raw_net_forward.1} parent=1 // pred_check
      _
    $region31: #{raw_net_forward.1} parent=1 // pred_check_branch
      %140 = sbr.rel (0) target = $region33
    $region32: #{raw_net_forward.1} parent=1 // pred_region
      %142 = vsyncadd [#allocation4], 0
      %s144 = sshll.u32 [#allocation7], 4
      %s145 = int_to_ptr.vmem [resolvable:$true] %s144
      %s146 = sshll.u32 %s5, 4
      %s147 = int_to_ptr.hbm [resolvable:$true] %s146
      %149 = dma.vmem_to_hbm [thread:$0]  %s145, 128, %s147, [#allocation4]
    $region33: #{raw_net_forward.1} parent=1 // pred_fallthru
      _
    // Predicated region
    $region34: #{raw_net_forward.1} parent=1 // pred_check
      _
    $region35: #{raw_net_forward.1} parent=1 // pred_check_branch
      %151 = sbr.rel (0) target = $region37
    $region36: #{raw_net_forward.1} parent=1 // pred_region
      %153 = dma.done [#allocation4], 128
    $region37: #{raw_net_forward.1} parent=1 // pred_fallthru
      _
    %154 = vsyncpa [#allocation3], 1
    %155 = vsyncpa [#allocation6], 1
    %156 = vsyncpa [#allocation4], 1

</llo_original>
